<compile_context>
chip_gen: v6e
topology: v6e:2x2x1
jax: 0.10.0
libtpu: 0.0.40
codegen_flags: <defaults>
</compile_context>

<pallas_src>
import jax
import jax.numpy as jnp
from jax.experimental import pallas as pl
from jax.experimental.pallas import tpu as pltpu

_HAS_BUFFERED = hasattr(pl, "Buffered")

# VMEM budgeting: plan tiles against ~40 MiB, tell the compiler ~48 MiB
# (safe on v5e/v6e 128 MiB and v7x 64 MiB physical VMEM).
_VMEM_BUDGET_BYTES = 40 * 1024 * 1024
_VMEM_LIMIT_BYTES = 48 * 1024 * 1024


def _round_up(v: int, m: int) -> int:
    return ((v + m - 1) // m) * m


# --------------------------------------------------------------------------- #
# Kernel
# --------------------------------------------------------------------------- #
def mlp_kernel(x_ref, w1_ref, w2_ref, b2_ref, o_ref):
    """One batch tile of the full MLP forward.

    x_ref:  (TB, F)  f32 flattened inputs (cast to bf16 in-kernel for the MXU)
    w1_ref: (F, H)   bf16 first linear weight (no bias)
    w2_ref: (H, Cp)  bf16 second linear weight with BN affine folded in, C padded to 128
    b2_ref: (1, Cp)  f32 second linear bias (BN shift folded in), C padded to 128
    o_ref:  (TB, Cp) f32 logits (padded classes)
    """
    # Cast at the MXU input: streams x from HBM once in f32, no wrapper cast pass.
    x_bf = x_ref[...].astype(jnp.bfloat16)
    # Linear 1 (bias=False): bf16 x bf16 -> f32 accumulate on the MXU.
    h = jnp.dot(x_bf, w1_ref[...], preferred_element_type=jnp.float32)
    # LeakyReLU (default negative_slope = 0.01), f32 on the VPU (v5e-safe).
    h = jnp.maximum(h, jnp.float32(0.01) * h)
    # BatchNorm1d (eval) affine is folded into w2/b2 in prepare_params().
    # TODO(synk): Dropout is identity in eval mode; training-mode stochastic mask not implemented.
    # Linear 2 (with bias): cast activation to bf16 for the MXU, f32 accumulation.
    o_ref[...] = jnp.dot(h.astype(w2_ref.dtype), w2_ref[...],
                         preferred_element_type=jnp.float32) + b2_ref[...]


# --------------------------------------------------------------------------- #
# Tiling / VMEM planning
# --------------------------------------------------------------------------- #
def _vmem_estimate(tb, F, H, Cp):
    """Rough VMEM working set for one pipelined batch tile."""
    return (2 * tb * F * 4        # x tile, f32, double-buffered
            + 2 * tb * Cp * 4     # out tile, f32, double-buffered
            + F * H * 2           # w1 bf16 (resident, single-buffered)
            + H * Cp * 2          # w2 bf16 (resident)
            + Cp * 4              # b2 f32
            + tb * F * 2          # in-kernel bf16 copy of the x tile
            + tb * H * 6)         # h f32 + h bf16 temporaries


def _choose_batch_tile(B, block_b, F, H, Cp):
    """Pick the batch tile: big (roofline), multiple of 16, fits VMEM,
    little padding waste, and >=2 grid steps when the batch allows (v7x 2 TCs)."""
    B16 = _round_up(max(B, 16), 16)
    tb = min(_round_up(block_b, 16), B16)

    # Residency check against the VMEM budget.
    # TODO(synk): if the weights alone (F*H*2 bytes) blow the budget (very large F
    # on v7x's 64 MiB VMEM), add an "arbitrary" F-reduction grid axis with an
    # f32 accumulator scratch instead of shrinking the batch tile.
    while tb > 16 and _vmem_estimate(tb, F, H, Cp) > _VMEM_BUDGET_BYTES:
        tb = _round_up(tb // 2, 16)

    # Cut batch-padding waste (every padded row is wasted HBM traffic + compute).
    def waste(t):
        return _round_up(B16, t) - B

    while tb > 16:
        smaller = _round_up(tb // 2, 16)
        if waste(tb) <= max(B // 8, 16) or waste(smaller) >= waste(tb):
            break
        tb = smaller

    # v7x has 2 TensorCores; the "parallel" batch axis only shards across them
    # with >=2 grid steps.  Split a single tile when the batch is big enough.
    if _round_up(B16, tb) // tb < 2 and tb >= 32:
        tb = _round_up(tb // 2, 16)

    return tb


def _build_pallas_call(B_pad, F, H, Cp, tb, flops, bytes_accessed):
    # Grid-invariant weights don't need double buffering; request 1 buffer.
    wkw = dict(pipeline_mode=pl.Buffered(1)) if _HAS_BUFFERED else {}
    return pl.pallas_call(
        mlp_kernel,
        out_shape=jax.ShapeDtypeStruct((B_pad, Cp), jnp.float32),
        grid_spec=pltpu.PrefetchScalarGridSpec(
            num_scalar_prefetch=0,
            grid=(B_pad // tb,),
            in_specs=[
                pl.BlockSpec((tb, F), lambda i: (i, 0)),          # x tile (streamed)
                pl.BlockSpec((F, H), lambda i: (0, 0), **wkw),    # w1 (resident)
                pl.BlockSpec((H, Cp), lambda i: (0, 0), **wkw),   # w2 (resident)
                pl.BlockSpec((1, Cp), lambda i: (0, 0), **wkw),   # b2 (resident)
            ],
            out_specs=pl.BlockSpec((tb, Cp), lambda i: (i, 0)),
        ),
        compiler_params=pltpu.CompilerParams(
            dimension_semantics=("parallel",),
            vmem_limit_bytes=_VMEM_LIMIT_BYTES,
        ),
        cost_estimate=pl.CostEstimate(
            flops=flops, transcendentals=0, bytes_accessed=bytes_accessed),
    )


# --------------------------------------------------------------------------- #
# One-time parameter prep (hoisted out of the per-call hot path)
# --------------------------------------------------------------------------- #
def prepare_params(w1, bn_scale, bn_shift, w2, b2):
    """Fold BatchNorm1d(eval) affine into the second linear, pad classes to a
    lane-dense multiple of 128, cast weights to bf16 for the MXU. Run once."""
    H = w2.shape[0]
    C = w2.shape[1]

    #   (h*scale + shift) @ w2 + b2 == h @ (diag(scale) @ w2) + (shift @ w2 + b2)
    w2_eff = (w2 * bn_scale.reshape(H, 1)).astype(jnp.float32)
    b2_eff = (b2.reshape(1, C) + bn_shift.reshape(1, H) @ w2).astype(jnp.float32)

    # Lane-dense padded classes -> unmasked stores, full MXU output tile.
    Cp = _round_up(max(C, 128), 128)
    if Cp != C:
        w2_eff = jnp.pad(w2_eff, ((0, 0), (0, Cp - C)))
        b2_eff = jnp.pad(b2_eff, ((0, 0), (0, Cp - C)))

    w1_bf = w1.astype(jnp.bfloat16)
    w2_bf = w2_eff.astype(jnp.bfloat16)
    return w1_bf, w2_bf, b2_eff, C


# --------------------------------------------------------------------------- #
# Forward
# --------------------------------------------------------------------------- #
def mlp_forward(x, w1_bf, w2_bf, b2_eff, num_classes, *, block_b=512):
    """x: [B, C, H, W] (NCHW) float32. Returns logits [B, num_classes] (float32)."""
    B = x.shape[0]
    F, H = w1_bf.shape
    Cp = w2_bf.shape[1]

    # Flatten exactly like torch.nn.Flatten. x stays f32; bf16 cast happens in-kernel.
    x2d = x.reshape(B, F)

    tb = _choose_batch_tile(B, block_b, F, H, Cp)
    B_pad = _round_up(B, tb)
    if B_pad != B:
        x2d = jnp.pad(x2d, ((0, B_pad - B), (0, 0)))

    flops = 2 * B_pad * (F * H + H * Cp)
    bytes_accessed = (B_pad * F * 4 + w1_bf.size * 2 + w2_bf.size * 2
                      + b2_eff.size * 4 + B_pad * Cp * 4)

    call = _build_pallas_call(B_pad, F, H, Cp, tb, flops, bytes_accessed)
    out = call(x2d, w1_bf, w2_bf, b2_eff)
    return out[:B, :num_classes]


# --------------------------------------------------------------------------- #
# Init / reference
# --------------------------------------------------------------------------- #
def init_params(key, num_features, num_hidden, num_classes):
    """Deterministic init mirroring PyTorch defaults (uniform +/- 1/sqrt(fan_in))."""
    k1, k2, k3 = jax.random.split(key, 3)
    bound1 = 1.0 / jnp.sqrt(num_features)
    bound2 = 1.0 / jnp.sqrt(num_hidden)
    # Stored as [in, out] (transpose of torch's [out, in]) so the kernel does x @ w.
    w1 = jax.random.uniform(k1, (num_features, num_hidden), jnp.float32, -bound1, bound1)
    w2 = jax.random.uniform(k2, (num_hidden, num_classes), jnp.float32, -bound2, bound2)
    b2 = jax.random.uniform(k3, (1, num_classes), jnp.float32, -bound2, bound2)

    # BatchNorm1d init: gamma=1, beta=0, running_mean=0, running_var=1, eps=1e-5
    gamma = jnp.ones((num_hidden,), jnp.float32)
    beta = jnp.zeros((num_hidden,), jnp.float32)
    running_mean = jnp.zeros((num_hidden,), jnp.float32)
    running_var = jnp.ones((num_hidden,), jnp.float32)
    eps = 1e-5
    bn_scale = (gamma / jnp.sqrt(running_var + eps)).reshape(1, num_hidden)
    bn_shift = (beta - running_mean * bn_scale[0]).reshape(1, num_hidden)
    return w1, bn_scale, bn_shift, w2, b2


def reference_forward(x, w1, bn_scale, bn_shift, w2, b2):
    """Pure f32 JAX reference of the eval-mode forward."""
    B = x.shape[0]
    x2d = x.reshape(B, -1)
    h = x2d @ w1
    h = jnp.where(h > 0, h, 0.01 * h)
    h = h * bn_scale + bn_shift
    return h @ w2 + b2


if __name__ == "__main__":
    # Small shapes consistent with the module's forward:
    # x: [B, C, H, W] = [2, 4, 16, 16] -> num_features = 1024
    B, Cin, Himg, Wimg = 2, 4, 16, 16
    num_features = Cin * Himg * Wimg   # 1024
    num_hidden = 128
    num_classes = 10
    drop_prob = 0.5                    # identity in eval mode

    key = jax.random.PRNGKey(0)
    kx, kp = jax.random.split(key)
    x = jax.random.normal(kx, (B, Cin, Himg, Wimg), jnp.float32)
    w1, bn_scale, bn_shift, w2, b2 = init_params(kp, num_features, num_hidden, num_classes)

    # One-time parameter prep (BN fold + class padding + bf16 weight cast).
    w1_bf, w2_bf, b2_eff, C_out = prepare_params(w1, bn_scale, bn_shift, w2, b2)

    logits = mlp_forward(x, w1_bf, w2_bf, b2_eff, C_out, block_b=512)
    logits = jax.block_until_ready(logits)

    # Sanity check vs. pure-JAX f32 reference (bf16 MXU inputs -> looser tolerance).
    ref = reference_forward(x, w1, bn_scale, bn_shift, w2, b2)
    assert logits.shape == (B, num_classes)
    assert jnp.allclose(logits, ref, atol=2e-2, rtol=2e-2), "mismatch vs reference"

    print("KERNEL_OK")
</pallas_src>

<mosaic_0001>
module attributes {stable_mosaic.version = 11 : i64} {
  func.func @mlp_kernel(%arg0: i32, %arg1: memref<16x1024xf32, #tpu.memory_space<vmem>>, %arg2: memref<1024x128xbf16, #tpu.memory_space<vmem>>, %arg3: memref<128x128xbf16, #tpu.memory_space<vmem>>, %arg4: memref<1x128xf32, #tpu.memory_space<vmem>>, %arg5: memref<16x128xf32, #tpu.memory_space<vmem>>) attributes {dimension_semantics = [#tpu.dimension_semantics<parallel>], iteration_bounds = array<i64: 1>, scalar_prefetch = 0 : i64, scratch_operands = 0 : i64, tpu.core_type = #tpu.core_type<tc>, window_params = [{transform_indices = @transform_0, window_bounds = array<i64: 16, 1024>}, {pipeline_mode = #tpu.pipeline_mode<synchronous>, transform_indices = @transform_1, window_bounds = array<i64: 1024, 128>}, {pipeline_mode = #tpu.pipeline_mode<synchronous>, transform_indices = @transform_2, window_bounds = array<i64: 128, 128>}, {pipeline_mode = #tpu.pipeline_mode<synchronous>, transform_indices = @transform_3, window_bounds = array<i64: 1, 128>}, {transform_indices = @transform_4, window_bounds = array<i64: 16, 128>}]} {
    %c0 = arith.constant 0 : index
    %c0_0 = arith.constant 0 : index
    %0 = vector.load %arg1[%c0, %c0_0] : memref<16x1024xf32, #tpu.memory_space<vmem>>, vector<16x1024xf32>
    %1 = arith.truncf %0 : vector<16x1024xf32> to vector<16x1024xbf16>
    %c0_1 = arith.constant 0 : index
    %c0_2 = arith.constant 0 : index
    %2 = vector.load %arg2[%c0_1, %c0_2] : memref<1024x128xbf16, #tpu.memory_space<vmem>>, vector<1024x128xbf16>
    %cst = arith.constant dense<0.000000e+00> : vector<16x128xf32>
    %3 = tpu.matmul %1, %2, %cst {dimension_numbers = #tpu.dot_dimension_numbers<[1], [0], [0], [1], [0, 0, 1, 1], [], []>} : vector<16x1024xbf16>, vector<1024x128xbf16>, vector<16x128xf32> -> vector<16x128xf32>
    %cst_3 = arith.constant 0.00999999977 : f32
    %4 = vector.broadcast %cst_3 : f32 to vector<16x128xf32>
    %5 = arith.mulf %4, %3 : vector<16x128xf32>
    %6 = arith.maximumf %3, %5 : vector<16x128xf32>
    %7 = arith.truncf %6 : vector<16x128xf32> to vector<16x128xbf16>
    %c0_4 = arith.constant 0 : index
    %c0_5 = arith.constant 0 : index
    %8 = vector.load %arg3[%c0_4, %c0_5] : memref<128x128xbf16, #tpu.memory_space<vmem>>, vector<128x128xbf16>
    %cst_6 = arith.constant dense<0.000000e+00> : vector<16x128xf32>
    %9 = tpu.matmul %7, %8, %cst_6 {dimension_numbers = #tpu.dot_dimension_numbers<[1], [0], [0], [1], [0, 0, 1, 1], [], []>} : vector<16x128xbf16>, vector<128x128xbf16>, vector<16x128xf32> -> vector<16x128xf32>
    %c0_7 = arith.constant 0 : index
    %c0_8 = arith.constant 0 : index
    %10 = vector.load %arg4[%c0_7, %c0_8] : memref<1x128xf32, #tpu.memory_space<vmem>>, vector<1x128xf32>
    %11 = vector.broadcast %10 : vector<1x128xf32> to vector<16x128xf32>
    %12 = arith.addf %9, %11 : vector<16x128xf32>
    %c0_9 = arith.constant 0 : index
    %c0_10 = arith.constant 0 : index
    %13 = vector.load %arg5[%c0_9, %c0_10] : memref<16x128xf32, #tpu.memory_space<vmem>>, vector<16x128xf32>
    tpu.vector_store %arg5[%c0_9, %c0_10], %12 {strides = array<i32>} : memref<16x128xf32, #tpu.memory_space<vmem>>, vector<16x128xf32>,
    return
  }
  func.func @transform_0(%arg0: i32) -> (i32, i32) {
    %c0_i32 = arith.constant 0 : i32
    %c0_i32_0 = arith.constant 0 : i32
    return %arg0, %c0_i32 : i32, i32
  }
  func.func @transform_1(%arg0: i32) -> (i32, i32) {
    %c0_i32 = arith.constant 0 : i32
    %c0_i32_0 = arith.constant 0 : i32
    %c0_i32_1 = arith.constant 0 : i32
    return %c0_i32, %c0_i32_0 : i32, i32
  }
  func.func @transform_2(%arg0: i32) -> (i32, i32) {
    %c0_i32 = arith.constant 0 : i32
    %c0_i32_0 = arith.constant 0 : i32
    %c0_i32_1 = arith.constant 0 : i32
    return %c0_i32, %c0_i32_0 : i32, i32
  }
  func.func @transform_3(%arg0: i32) -> (i32, i32) {
    %c0_i32 = arith.constant 0 : i32
    %c0_i32_0 = arith.constant 0 : i32
    %c0_i32_1 = arith.constant 0 : i32
    return %c0_i32, %c0_i32_0 : i32, i32
  }
  func.func @transform_4(%arg0: i32) -> (i32, i32) {
    %c0_i32 = arith.constant 0 : i32
    %c0_i32_0 = arith.constant 0 : i32
    return %arg0, %c0_i32 : i32, i32
  }
}

</mosaic_0001>

<llo_original>
// kernel: tpu_custom_call.1
$region0: #{tpu_custom_call.1}
  #allocation0 [shape = 'u32[]', space=smem, size = 0x4, offset = 0x4, fixed_abs, tag = 'smem constant byte address 0x4 - core index']
  #allocation1 [shape = 'u32[144,128]{1,0:T(1,128)}', space=vmem, size = 0x12000, scoped, tag = 'internal scratch']
  %s0 = inlined_call_operand.hbm [shape: f32[16,1024], index: 0, kind: input, shape index: {}]
  %s1 = inlined_call_operand.hbm [shape: bf16[1024,128], index: 1, kind: input, shape index: {}]
  %s2 = inlined_call_operand.hbm [shape: bf16[128,128], index: 2, kind: input, shape index: {}]
  %s3 = inlined_call_operand.vmem [shape: f32[1,128], index: 3, kind: input, shape index: {}]
  %s4 = inlined_call_operand.hbm [shape: f32[16,128], index: 4, kind: output, shape index: {}]
  %s5 = sld [smem:[#allocation0]]
  $region38: #{tpu_custom_call.1} parent=0
    _
  %s7 = ssub.s32 1, %s5
  %s8 = scalar_select 0, %s7, %s5
  $region1: #{tpu_custom_call.1} parent=0
    #allocation2 [shape = 'u8[65536]{0}', space=vmem, size = 0x10000, scoped, tag = 'input window, operand 0, single buffered']
    #allocation3 [shape = 's32[1]{0}', space=sflag, size = 0x4, scoped, tag = 'scoped memory for tpu_custom_call.1']
    #allocation4 [shape = 's32[1]{0}', space=sflag, size = 0x4, scoped, tag = 'scoped memory for tpu_custom_call.1']
    #allocation5 [shape = 'u8[262144]{0}', space=vmem, size = 0x40000, scoped, tag = 'input window, operand 1, single buffered']
    #allocation6 [shape = 's32[1]{0}', space=sflag, size = 0x4, scoped, tag = 'scoped memory for tpu_custom_call.1']
    #allocation7 [shape = 'u8[32768]{0}', space=vmem, size = 0x8000, scoped, tag = 'input window, operand 2, single buffered']
    #allocation8 [shape = 'u8[8192]{0}', space=vmem, size = 0x2000, scoped, tag = 'output window, operand 0, single buffered']
    %9 = vsyncpa [#allocation3], 0
    %10 = vsyncpa [#allocation6], 0
    %11 = vsyncpa [#allocation4], 0
    // Predicated region
    $region2: #{tpu_custom_call.1} parent=1 // pred_check
      _
    $region3: #{tpu_custom_call.1} parent=1 // pred_check_branch
      %13 = sbr.rel (0) target = $region5
    $region4: #{tpu_custom_call.1} parent=1 // pred_region
      %s15 = ssub.s32 2048, 2048
      %16 = vsyncadd [#allocation3], %s15
      %s17 = sshll.u32 [#allocation2], 4
      %s18 = int_to_ptr.vmem [resolvable:$true] %s17
      %23 = dma.hbm_to_vmem [thread:$0]  %s0, 2048, %s18, [#allocation3], 1024, 1024, 64
    $region5: #{tpu_custom_call.1} parent=1 // pred_fallthru
      _
    // Predicated region
    $region6: #{tpu_custom_call.1} parent=1 // pred_check
      _
    $region7: #{tpu_custom_call.1} parent=1 // pred_check_branch
      %25 = sbr.rel (0) target = $region9
    $region8: #{tpu_custom_call.1} parent=1 // pred_region
      %s27 = ssub.s32 8192, 8192
      %28 = vsyncadd [#allocation6], %s27
      %s29 = sshll.u32 [#allocation5], 4
      %s30 = int_to_ptr.vmem [resolvable:$true] %s29
      %35 = dma.hbm_to_vmem [thread:$0]  %s1, 8192, %s30, [#allocation6], 64, 64, 4
    $region9: #{tpu_custom_call.1} parent=1 // pred_fallthru
      _
    // Predicated region
    $region10: #{tpu_custom_call.1} parent=1 // pred_check
      _
    $region11: #{tpu_custom_call.1} parent=1 // pred_check_branch
      %37 = sbr.rel (0) target = $region13
    $region12: #{tpu_custom_call.1} parent=1 // pred_region
      %s39 = ssub.s32 1024, 1024
      %40 = vsyncadd [#allocation6], %s39
      %s41 = sshll.u32 [#allocation7], 4
      %s42 = int_to_ptr.vmem [resolvable:$true] %s41
      %47 = dma.hbm_to_vmem [thread:$0]  %s2, 1024, %s42, [#allocation6], 64, 64, 4
    $region13: #{tpu_custom_call.1} parent=1 // pred_fallthru
      _
    // Predicated region
    $region14: #{tpu_custom_call.1} parent=1 // pred_check
      _
    $region15: #{tpu_custom_call.1} parent=1 // pred_check_branch
      %49 = sbr.rel (0) target = $region17
    $region16: #{tpu_custom_call.1} parent=1 // pred_region
      _
    $region17: #{tpu_custom_call.1} parent=1 // pred_fallthru
      _
    // Predicated region
    $region18: #{tpu_custom_call.1} parent=1 // pred_check
      _
    $region19: #{tpu_custom_call.1} parent=1 // pred_check_branch
      %51 = sbr.rel (0) target = $region21
    $region20: #{tpu_custom_call.1} parent=1 // pred_region
      %52 = dma.done [#allocation3], 2048
    $region21: #{tpu_custom_call.1} parent=1 // pred_fallthru
      _
    // Predicated region
    $region22: #{tpu_custom_call.1} parent=1 // pred_check
      _
    $region23: #{tpu_custom_call.1} parent=1 // pred_check_branch
      %54 = sbr.rel (0) target = $region25
    $region24: #{tpu_custom_call.1} parent=1 // pred_region
      %55 = dma.done [#allocation6], 8192
    $region25: #{tpu_custom_call.1} parent=1 // pred_fallthru
      _
    // Predicated region
    $region26: #{tpu_custom_call.1} parent=1 // pred_check
      _
    $region27: #{tpu_custom_call.1} parent=1 // pred_check_branch
      %57 = sbr.rel (0) target = $region29
    $region28: #{tpu_custom_call.1} parent=1 // pred_region
      %58 = dma.done [#allocation6], 1024
    $region29: #{tpu_custom_call.1} parent=1 // pred_fallthru
      _
    %v60 = vld [vmem:[#allocation2] sm:$0xff]
    %v61 = vld [vmem:[#allocation2 + $0x8] sm:$0xff]
    %v62 = vld [vmem:[#allocation2 + $0x10] sm:$0xff]
    %v63 = vld [vmem:[#allocation2 + $0x18] sm:$0xff]
    %v64 = vld [vmem:[#allocation2 + $0x20] sm:$0xff]
    %v65 = vld [vmem:[#allocation2 + $0x28] sm:$0xff]
    %v66 = vld [vmem:[#allocation2 + $0x30] sm:$0xff]
    %v67 = vld [vmem:[#allocation2 + $0x38] sm:$0xff]
    %v68 = vld [vmem:[#allocation2 + $0x40] sm:$0xff]
    %v69 = vld [vmem:[#allocation2 + $0x48] sm:$0xff]
    %v70 = vld [vmem:[#allocation2 + $0x50] sm:$0xff]
    %v71 = vld [vmem:[#allocation2 + $0x58] sm:$0xff]
    %v72 = vld [vmem:[#allocation2 + $0x60] sm:$0xff]
    %v73 = vld [vmem:[#allocation2 + $0x68] sm:$0xff]
    %v74 = vld [vmem:[#allocation2 + $0x70] sm:$0xff]
    %v75 = vld [vmem:[#allocation2 + $0x78] sm:$0xff]
    %v76 = vpack.c.bf16 %v68, %v60
    %v77 = vpack.c.bf16 %v69, %v61
    %v78 = vpack.c.bf16 %v70, %v62
    %v79 = vpack.c.bf16 %v71, %v63
    %v80 = vpack.c.bf16 %v72, %v64
    %v81 = vpack.c.bf16 %v73, %v65
    %v82 = vpack.c.bf16 %v74, %v66
    %v83 = vpack.c.bf16 %v75, %v67
    %v84 = vld [vmem:[#allocation5] sm:$0xf]
    %v85 = vld [vmem:[#allocation5 + $0x4] sm:$0xf]
    %v86 = vld [vmem:[#allocation5 + $0x8] sm:$0xf]
    %v87 = vld [vmem:[#allocation5 + $0xc] sm:$0xf]
    %v88 = vld [vmem:[#allocation5 + $0x10] sm:$0xf]
    %v89 = vld [vmem:[#allocation5 + $0x14] sm:$0xf]
    %v90 = vld [vmem:[#allocation5 + $0x18] sm:$0xf]
    %v91 = vld [vmem:[#allocation5 + $0x1c] sm:$0xf]
    %v92 = vld [vmem:[#allocation5 + $0x20] sm:$0xf]
    %v93 = vld [vmem:[#allocation5 + $0x24] sm:$0xf]
    %v94 = vld [vmem:[#allocation5 + $0x28] sm:$0xf]
    %v95 = vld [vmem:[#allocation5 + $0x2c] sm:$0xf]
    %v96 = vld [vmem:[#allocation5 + $0x30] sm:$0xf]
    %v97 = vld [vmem:[#allocation5 + $0x34] sm:$0xf]
    %v98 = vld [vmem:[#allocation5 + $0x38] sm:$0xf]
    %v99 = vld [vmem:[#allocation5 + $0x3c] sm:$0xf]
    %v100 = vld [vmem:[#allocation5 + $0x40] sm:$0xf]
    %v101 = vld [vmem:[#allocation5 + $0x44] sm:$0xf]
    %v102 = vld [vmem:[#allocation5 + $0x48] sm:$0xf]
    %v103 = vld [vmem:[#allocation5 + $0x4c] sm:$0xf]
    %v104 = vld [vmem:[#allocation5 + $0x50] sm:$0xf]
    %v105 = vld [vmem:[#allocation5 + $0x54] sm:$0xf]
    %v106 = vld [vmem:[#allocation5 + $0x58] sm:$0xf]
    %v107 = vld [vmem:[#allocation5 + $0x5c] sm:$0xf]
    %v108 = vld [vmem:[#allocation5 + $0x60] sm:$0xf]
    %v109 = vld [vmem:[#allocation5 + $0x64] sm:$0xf]
    %v110 = vld [vmem:[#allocation5 + $0x68] sm:$0xf]
    %v111 = vld [vmem:[#allocation5 + $0x6c] sm:$0xf]
    %v112 = vld [vmem:[#allocation5 + $0x70] sm:$0xf]
    %v113 = vld [vmem:[#allocation5 + $0x74] sm:$0xf]
    %v114 = vld [vmem:[#allocation5 + $0x78] sm:$0xf]
    %v115 = vld [vmem:[#allocation5 + $0x7c] sm:$0xf]
    %v116 = vld [vmem:[#allocation5 + $0x80] sm:$0xf]
    %v117 = vld [vmem:[#allocation5 + $0x84] sm:$0xf]
    %v118 = vld [vmem:[#allocation5 + $0x88] sm:$0xf]
    %v119 = vld [vmem:[#allocation5 + $0x8c] sm:$0xf]
    %v120 = vld [vmem:[#allocation5 + $0x90] sm:$0xf]
    %v121 = vld [vmem:[#allocation5 + $0x94] sm:$0xf]
    %v122 = vld [vmem:[#allocation5 + $0x98] sm:$0xf]
    %v123 = vld [vmem:[#allocation5 + $0x9c] sm:$0xf]
    %v124 = vld [vmem:[#allocation5 + $0xa0] sm:$0xf]
    %v125 = vld [vmem:[#allocation5 + $0xa4] sm:$0xf]
    %v126 = vld [vmem:[#allocation5 + $0xa8] sm:$0xf]
    %v127 = vld [vmem:[#allocation5 + $0xac] sm:$0xf]
    %v128 = vld [vmem:[#allocation5 + $0xb0] sm:$0xf]
    %v129 = vld [vmem:[#allocation5 + $0xb4] sm:$0xf]
    %v130 = vld [vmem:[#allocation5 + $0xb8] sm:$0xf]
    %v131 = vld [vmem:[#allocation5 + $0xbc] sm:$0xf]
    %v132 = vld [vmem:[#allocation5 + $0xc0] sm:$0xf]
    %v133 = vld [vmem:[#allocation5 + $0xc4] sm:$0xf]
    %v134 = vld [vmem:[#allocation5 + $0xc8] sm:$0xf]
    %v135 = vld [vmem:[#allocation5 + $0xcc] sm:$0xf]
    %v136 = vld [vmem:[#allocation5 + $0xd0] sm:$0xf]
    %v137 = vld [vmem:[#allocation5 + $0xd4] sm:$0xf]
    %v138 = vld [vmem:[#allocation5 + $0xd8] sm:$0xf]
    %v139 = vld [vmem:[#allocation5 + $0xdc] sm:$0xf]
    %v140 = vld [vmem:[#allocation5 + $0xe0] sm:$0xf]
    %v141 = vld [vmem:[#allocation5 + $0xe4] sm:$0xf]
    %v142 = vld [vmem:[#allocation5 + $0xe8] sm:$0xf]
    %v143 = vld [vmem:[#allocation5 + $0xec] sm:$0xf]
    %v144 = vld [vmem:[#allocation5 + $0xf0] sm:$0xf]
    %v145 = vld [vmem:[#allocation5 + $0xf4] sm:$0xf]
    %v146 = vld [vmem:[#allocation5 + $0xf8] sm:$0xf]
    %v147 = vld [vmem:[#allocation5 + $0xfc] sm:$0xf]
    %v148 = vld [vmem:[#allocation5 + $0x100] sm:$0xf]
    %v149 = vld [vmem:[#allocation5 + $0x104] sm:$0xf]
    %v150 = vld [vmem:[#allocation5 + $0x108] sm:$0xf]
    %v151 = vld [vmem:[#allocation5 + $0x10c] sm:$0xf]
    %v152 = vld [vmem:[#allocation5 + $0x110] sm:$0xf]
    %v153 = vld [vmem:[#allocation5 + $0x114] sm:$0xf]
    %v154 = vld [vmem:[#allocation5 + $0x118] sm:$0xf]
    %v155 = vld [vmem:[#allocation5 + $0x11c] sm:$0xf]
    %v156 = vld [vmem:[#allocation5 + $0x120] sm:$0xf]
    %v157 = vld [vmem:[#allocation5 + $0x124] sm:$0xf]
    %v158 = vld [vmem:[#allocation5 + $0x128] sm:$0xf]
    %v159 = vld [vmem:[#allocation5 + $0x12c] sm:$0xf]
    %v160 = vld [vmem:[#allocation5 + $0x130] sm:$0xf]
    %v161 = vld [vmem:[#allocation5 + $0x134] sm:$0xf]
    %v162 = vld [vmem:[#allocation5 + $0x138] sm:$0xf]
    %v163 = vld [vmem:[#allocation5 + $0x13c] sm:$0xf]
    %v164 = vld [vmem:[#allocation5 + $0x140] sm:$0xf]
    %v165 = vld [vmem:[#allocation5 + $0x144] sm:$0xf]
    %v166 = vld [vmem:[#allocation5 + $0x148] sm:$0xf]
    %v167 = vld [vmem:[#allocation5 + $0x14c] sm:$0xf]
    %v168 = vld [vmem:[#allocation5 + $0x150] sm:$0xf]
    %v169 = vld [vmem:[#allocation5 + $0x154] sm:$0xf]
    %v170 = vld [vmem:[#allocation5 + $0x158] sm:$0xf]
    %v171 = vld [vmem:[#allocation5 + $0x15c] sm:$0xf]
    %v172 = vld [vmem:[#allocation5 + $0x160] sm:$0xf]
    %v173 = vld [vmem:[#allocation5 + $0x164] sm:$0xf]
    %v174 = vld [vmem:[#allocation5 + $0x168] sm:$0xf]
    %v175 = vld [vmem:[#allocation5 + $0x16c] sm:$0xf]
    %v176 = vld [vmem:[#allocation5 + $0x170] sm:$0xf]
    %v177 = vld [vmem:[#allocation5 + $0x174] sm:$0xf]
    %v178 = vld [vmem:[#allocation5 + $0x178] sm:$0xf]
    %v179 = vld [vmem:[#allocation5 + $0x17c] sm:$0xf]
    %v180 = vld [vmem:[#allocation5 + $0x180] sm:$0xf]
    %v181 = vld [vmem:[#allocation5 + $0x184] sm:$0xf]
    %v182 = vld [vmem:[#allocation5 + $0x188] sm:$0xf]
    %v183 = vld [vmem:[#allocation5 + $0x18c] sm:$0xf]
    %v184 = vld [vmem:[#allocation5 + $0x190] sm:$0xf]
    %v185 = vld [vmem:[#allocation5 + $0x194] sm:$0xf]
    %v186 = vld [vmem:[#allocation5 + $0x198] sm:$0xf]
    %v187 = vld [vmem:[#allocation5 + $0x19c] sm:$0xf]
    %v188 = vld [vmem:[#allocation5 + $0x1a0] sm:$0xf]
    %v189 = vld [vmem:[#allocation5 + $0x1a4] sm:$0xf]
    %v190 = vld [vmem:[#allocation5 + $0x1a8] sm:$0xf]
    %v191 = vld [vmem:[#allocation5 + $0x1ac] sm:$0xf]
    %v192 = vld [vmem:[#allocation5 + $0x1b0] sm:$0xf]
    %v193 = vld [vmem:[#allocation5 + $0x1b4] sm:$0xf]
    %v194 = vld [vmem:[#allocation5 + $0x1b8] sm:$0xf]
    %v195 = vld [vmem:[#allocation5 + $0x1bc] sm:$0xf]
    %v196 = vld [vmem:[#allocation5 + $0x1c0] sm:$0xf]
    %v197 = vld [vmem:[#allocation5 + $0x1c4] sm:$0xf]
    %v198 = vld [vmem:[#allocation5 + $0x1c8] sm:$0xf]
    %v199 = vld [vmem:[#allocation5 + $0x1cc] sm:$0xf]
    %v200 = vld [vmem:[#allocation5 + $0x1d0] sm:$0xf]
    %v201 = vld [vmem:[#allocation5 + $0x1d4] sm:$0xf]
    %v202 = vld [vmem:[#allocation5 + $0x1d8] sm:$0xf]
    %v203 = vld [vmem:[#allocation5 + $0x1dc] sm:$0xf]
    %v204 = vld [vmem:[#allocation5 + $0x1e0] sm:$0xf]
    %v205 = vld [vmem:[#allocation5 + $0x1e4] sm:$0xf]
    %v206 = vld [vmem:[#allocation5 + $0x1e8] sm:$0xf]
    %v207 = vld [vmem:[#allocation5 + $0x1ec] sm:$0xf]
    %v208 = vld [vmem:[#allocation5 + $0x1f0] sm:$0xf]
    %v209 = vld [vmem:[#allocation5 + $0x1f4] sm:$0xf]
    %v210 = vld [vmem:[#allocation5 + $0x1f8] sm:$0xf]
    %v211 = vld [vmem:[#allocation5 + $0x1fc] sm:$0xf]
    %v340 = vunpack.c.l.b16 %v84
    %v341 = vunpack.c.l.b16 %v85
    %v342 = vunpack.c.l.b16 %v86
    %v343 = vunpack.c.l.b16 %v87
    %v344 = vunpack.c.l.b16 %v88
    %v345 = vunpack.c.l.b16 %v89
    %v346 = vunpack.c.l.b16 %v90
    %v347 = vunpack.c.l.b16 %v91
    %v348 = vunpack.c.l.b16 %v92
    %v349 = vunpack.c.l.b16 %v93
    %v350 = vunpack.c.l.b16 %v94
    %v351 = vunpack.c.l.b16 %v95
    %v352 = vunpack.c.l.b16 %v96
    %v353 = vunpack.c.l.b16 %v97
    %v354 = vunpack.c.l.b16 %v98
    %v355 = vunpack.c.l.b16 %v99
    %v356 = vunpack.c.l.b16 %v100
    %v357 = vunpack.c.l.b16 %v101
    %v358 = vunpack.c.l.b16 %v102
    %v359 = vunpack.c.l.b16 %v103
    %v360 = vunpack.c.l.b16 %v104
    %v361 = vunpack.c.l.b16 %v105
    %v362 = vunpack.c.l.b16 %v106
    %v363 = vunpack.c.l.b16 %v107
    %v364 = vunpack.c.l.b16 %v108
    %v365 = vunpack.c.l.b16 %v109
    %v366 = vunpack.c.l.b16 %v110
    %v367 = vunpack.c.l.b16 %v111
    %v368 = vunpack.c.l.b16 %v112
    %v369 = vunpack.c.l.b16 %v113
    %v370 = vunpack.c.l.b16 %v114
    %v371 = vunpack.c.l.b16 %v115
    %v372 = vunpack.c.l.b16 %v116
    %v373 = vunpack.c.l.b16 %v117
    %v374 = vunpack.c.l.b16 %v118
    %v375 = vunpack.c.l.b16 %v119
    %v376 = vunpack.c.l.b16 %v120
    %v377 = vunpack.c.l.b16 %v121
    %v378 = vunpack.c.l.b16 %v122
    %v379 = vunpack.c.l.b16 %v123
    %v380 = vunpack.c.l.b16 %v124
    %v381 = vunpack.c.l.b16 %v125
    %v382 = vunpack.c.l.b16 %v126
    %v383 = vunpack.c.l.b16 %v127
    %v384 = vunpack.c.l.b16 %v128
    %v385 = vunpack.c.l.b16 %v129
    %v386 = vunpack.c.l.b16 %v130
    %v387 = vunpack.c.l.b16 %v131
    %v388 = vunpack.c.l.b16 %v132
    %v389 = vunpack.c.l.b16 %v133
    %v390 = vunpack.c.l.b16 %v134
    %v391 = vunpack.c.l.b16 %v135
    %v392 = vunpack.c.l.b16 %v136
    %v393 = vunpack.c.l.b16 %v137
    %v394 = vunpack.c.l.b16 %v138
    %v395 = vunpack.c.l.b16 %v139
    %v396 = vunpack.c.l.b16 %v140
    %v397 = vunpack.c.l.b16 %v141
    %v398 = vunpack.c.l.b16 %v142
    %v399 = vunpack.c.l.b16 %v143
    %v400 = vunpack.c.l.b16 %v144
    %v401 = vunpack.c.l.b16 %v145
    %v402 = vunpack.c.l.b16 %v146
    %v403 = vunpack.c.l.b16 %v147
    %v404 = vunpack.c.l.b16 %v148
    %v405 = vunpack.c.l.b16 %v149
    %v406 = vunpack.c.l.b16 %v150
    %v407 = vunpack.c.l.b16 %v151
    %v408 = vunpack.c.l.b16 %v152
    %v409 = vunpack.c.l.b16 %v153
    %v410 = vunpack.c.l.b16 %v154
    %v411 = vunpack.c.l.b16 %v155
    %v412 = vunpack.c.l.b16 %v156
    %v413 = vunpack.c.l.b16 %v157
    %v414 = vunpack.c.l.b16 %v158
    %v415 = vunpack.c.l.b16 %v159
    %v416 = vunpack.c.l.b16 %v160
    %v417 = vunpack.c.l.b16 %v161
    %v418 = vunpack.c.l.b16 %v162
    %v419 = vunpack.c.l.b16 %v163
    %v420 = vunpack.c.l.b16 %v164
    %v421 = vunpack.c.l.b16 %v165
    %v422 = vunpack.c.l.b16 %v166
    %v423 = vunpack.c.l.b16 %v167
    %v424 = vunpack.c.l.b16 %v168
    %v425 = vunpack.c.l.b16 %v169
    %v426 = vunpack.c.l.b16 %v170
    %v427 = vunpack.c.l.b16 %v171
    %v428 = vunpack.c.l.b16 %v172
    %v429 = vunpack.c.l.b16 %v173
    %v430 = vunpack.c.l.b16 %v174
    %v431 = vunpack.c.l.b16 %v175
    %v432 = vunpack.c.l.b16 %v176
    %v433 = vunpack.c.l.b16 %v177
    %v434 = vunpack.c.l.b16 %v178
    %v435 = vunpack.c.l.b16 %v179
    %v436 = vunpack.c.l.b16 %v180
    %v437 = vunpack.c.l.b16 %v181
    %v438 = vunpack.c.l.b16 %v182
    %v439 = vunpack.c.l.b16 %v183
    %v440 = vunpack.c.l.b16 %v184
    %v441 = vunpack.c.l.b16 %v185
    %v442 = vunpack.c.l.b16 %v186
    %v443 = vunpack.c.l.b16 %v187
    %v444 = vunpack.c.l.b16 %v188
    %v445 = vunpack.c.l.b16 %v189
    %v446 = vunpack.c.l.b16 %v190
    %v447 = vunpack.c.l.b16 %v191
    %v448 = vunpack.c.l.b16 %v192
    %v449 = vunpack.c.l.b16 %v193
    %v450 = vunpack.c.l.b16 %v194
    %v451 = vunpack.c.l.b16 %v195
    %v452 = vunpack.c.l.b16 %v196
    %v453 = vunpack.c.l.b16 %v197
    %v454 = vunpack.c.l.b16 %v198
    %v455 = vunpack.c.l.b16 %v199
    %v456 = vunpack.c.l.b16 %v200
    %v457 = vunpack.c.l.b16 %v201
    %v458 = vunpack.c.l.b16 %v202
    %v459 = vunpack.c.l.b16 %v203
    %v460 = vunpack.c.l.b16 %v204
    %v461 = vunpack.c.l.b16 %v205
    %v462 = vunpack.c.l.b16 %v206
    %v463 = vunpack.c.l.b16 %v207
    %v464 = vunpack.c.l.b16 %v208
    %v465 = vunpack.c.l.b16 %v209
    %v466 = vunpack.c.l.b16 %v210
    %v467 = vunpack.c.l.b16 %v211
    %v468 = vpack.c.b16 %v341, %v340
    %v469 = vpack.c.b16 %v343, %v342
    %v470 = vpack.c.b16 %v345, %v344
    %v471 = vpack.c.b16 %v347, %v346
    %v472 = vpack.c.b16 %v349, %v348
    %v473 = vpack.c.b16 %v351, %v350
    %v474 = vpack.c.b16 %v353, %v352
    %v475 = vpack.c.b16 %v355, %v354
    %v476 = vpack.c.b16 %v357, %v356
    %v477 = vpack.c.b16 %v359, %v358
    %v478 = vpack.c.b16 %v361, %v360
    %v479 = vpack.c.b16 %v363, %v362
    %v480 = vpack.c.b16 %v365, %v364
    %v481 = vpack.c.b16 %v367, %v366
    %v482 = vpack.c.b16 %v369, %v368
    %v483 = vpack.c.b16 %v371, %v370
    %v484 = vpack.c.b16 %v373, %v372
    %v485 = vpack.c.b16 %v375, %v374
    %v486 = vpack.c.b16 %v377, %v376
    %v487 = vpack.c.b16 %v379, %v378
    %v488 = vpack.c.b16 %v381, %v380
    %v489 = vpack.c.b16 %v383, %v382
    %v490 = vpack.c.b16 %v385, %v384
    %v491 = vpack.c.b16 %v387, %v386
    %v492 = vpack.c.b16 %v389, %v388
    %v493 = vpack.c.b16 %v391, %v390
    %v494 = vpack.c.b16 %v393, %v392
    %v495 = vpack.c.b16 %v395, %v394
    %v496 = vpack.c.b16 %v397, %v396
    %v497 = vpack.c.b16 %v399, %v398
    %v498 = vpack.c.b16 %v401, %v400
    %v499 = vpack.c.b16 %v403, %v402
    %v500 = vpack.c.b16 %v405, %v404
    %v501 = vpack.c.b16 %v407, %v406
    %v502 = vpack.c.b16 %v409, %v408
    %v503 = vpack.c.b16 %v411, %v410
    %v504 = vpack.c.b16 %v413, %v412
    %v505 = vpack.c.b16 %v415, %v414
    %v506 = vpack.c.b16 %v417, %v416
    %v507 = vpack.c.b16 %v419, %v418
    %v508 = vpack.c.b16 %v421, %v420
    %v509 = vpack.c.b16 %v423, %v422
    %v510 = vpack.c.b16 %v425, %v424
    %v511 = vpack.c.b16 %v427, %v426
    %v512 = vpack.c.b16 %v429, %v428
    %v513 = vpack.c.b16 %v431, %v430
    %v514 = vpack.c.b16 %v433, %v432
    %v515 = vpack.c.b16 %v435, %v434
    %v516 = vpack.c.b16 %v437, %v436
    %v517 = vpack.c.b16 %v439, %v438
    %v518 = vpack.c.b16 %v441, %v440
    %v519 = vpack.c.b16 %v443, %v442
    %v520 = vpack.c.b16 %v445, %v444
    %v521 = vpack.c.b16 %v447, %v446
    %v522 = vpack.c.b16 %v449, %v448
    %v523 = vpack.c.b16 %v451, %v450
    %v524 = vpack.c.b16 %v453, %v452
    %v525 = vpack.c.b16 %v455, %v454
    %v526 = vpack.c.b16 %v457, %v456
    %v527 = vpack.c.b16 %v459, %v458
    %v528 = vpack.c.b16 %v461, %v460
    %v529 = vpack.c.b16 %v463, %v462
    %v530 = vpack.c.b16 %v465, %v464
    %v531 = vpack.c.b16 %v467, %v466
    %596 = vmatprep.subr.bf16.mxu0 0
    %597 = vmatpush1.bf16.msra.mxu0 %v475
    %598 = vmatprep.subr.bf16.mxu0 0
    %599 = vmatpush1.bf16.msra.mxu0 %v474
    %600 = vmatprep.subr.bf16.mxu0 0
    %601 = vmatpush1.bf16.msra.mxu0 %v473
    %602 = vmatprep.subr.bf16.mxu0 0
    %603 = vmatpush1.bf16.msra.mxu0 %v472
    %604 = vmatprep.subr.bf16.mxu0 0
    %605 = vmatpush1.bf16.msra.mxu0 %v471
    %606 = vmatprep.subr.bf16.mxu0 0
    %607 = vmatpush1.bf16.msra.mxu0 %v470
    %608 = vmatprep.subr.bf16.mxu0 0
    %609 = vmatpush1.bf16.msra.mxu0 %v469
    %610 = vmatprep.subr.bf16.mxu0 0
    %611 = vmatpush1.bf16.msra.mxu0 %v468
    %612 = vmatprep.subr.bf16.mxu0 0
    %613 = vmatpush2.bf16.msra.mxu0 %v483
    %614 = vmatprep.subr.bf16.mxu0 0
    %615 = vmatpush2.bf16.msra.mxu0 %v482
    %616 = vmatprep.subr.bf16.mxu0 0
    %617 = vmatpush2.bf16.msra.mxu0 %v481
    %618 = vmatprep.subr.bf16.mxu0 0
    %619 = vmatpush2.bf16.msra.mxu0 %v480
    %620 = vmatprep.subr.bf16.mxu0 0
    %621 = vmatpush2.bf16.msra.mxu0 %v479
    %622 = vmatprep.subr.bf16.mxu0 0
    %623 = vmatpush2.bf16.msra.mxu0 %v478
    %624 = vmatprep.subr.bf16.mxu0 0
    %625 = vmatpush2.bf16.msra.mxu0 %v477
    %626 = vmatprep.subr.bf16.mxu0 0
    %627 = vmatpush2.bf16.msra.mxu0 %v476
    %628 = vmatprep.mubr.bf16.mxu0 %v77
    %629 = vmatmul.mubr.bf16.gmra.mxu0 %v76
    %v630 = vpop.f32.mrf.mxu0
    %v631 = vadd.f32 0.0, %v630
    %v632 = vpop.f32.mrf.mxu0
    %v633 = vpop.f32.mrf.mxu0
    %v634 = vadd.f32 0.0, %v633
    %v635 = vpop.f32.mrf.mxu0
    %636 = vdwg.mxu0
    %637 = vmatprep.subr.bf16.mxu0 0
    %638 = vmatpush1.bf16.msra.mxu0 %v491
    %639 = vmatprep.subr.bf16.mxu0 0
    %640 = vmatpush1.bf16.msra.mxu0 %v490
    %641 = vmatprep.subr.bf16.mxu0 0
    %642 = vmatpush1.bf16.msra.mxu0 %v489
    %643 = vmatprep.subr.bf16.mxu0 0
    %644 = vmatpush1.bf16.msra.mxu0 %v488
    %645 = vmatprep.subr.bf16.mxu0 0
    %646 = vmatpush1.bf16.msra.mxu0 %v487
    %647 = vmatprep.subr.bf16.mxu0 0
    %648 = vmatpush1.bf16.msra.mxu0 %v486
    %649 = vmatprep.subr.bf16.mxu0 0
    %650 = vmatpush1.bf16.msra.mxu0 %v485
    %651 = vmatprep.subr.bf16.mxu0 0
    %652 = vmatpush1.bf16.msra.mxu0 %v484
    %653 = vmatprep.subr.bf16.mxu0 0
    %654 = vmatpush2.bf16.msra.mxu0 %v499
    %655 = vmatprep.subr.bf16.mxu0 0
    %656 = vmatpush2.bf16.msra.mxu0 %v498
    %657 = vmatprep.subr.bf16.mxu0 0
    %658 = vmatpush2.bf16.msra.mxu0 %v497
    %659 = vmatprep.subr.bf16.mxu0 0
    %660 = vmatpush2.bf16.msra.mxu0 %v496
    %661 = vmatprep.subr.bf16.mxu0 0
    %662 = vmatpush2.bf16.msra.mxu0 %v495
    %663 = vmatprep.subr.bf16.mxu0 0
    %664 = vmatpush2.bf16.msra.mxu0 %v494
    %665 = vmatprep.subr.bf16.mxu0 0
    %666 = vmatpush2.bf16.msra.mxu0 %v493
    %667 = vmatprep.subr.bf16.mxu0 0
    %668 = vmatpush2.bf16.msra.mxu0 %v492
    %669 = vmatprep.mubr.bf16.mxu0 %v79
    %670 = vmatmul.mubr.bf16.gmra.mxu0 %v78
    %v671 = vpop.f32.mrf.mxu0
    %v672 = vadd.f32 %v631, %v671
    %v673 = vpop.f32.mrf.mxu0
    %v674 = vpop.f32.mrf.mxu0
    %v675 = vadd.f32 %v634, %v674
    %v676 = vpop.f32.mrf.mxu0
    %677 = vdwg.mxu0
    %678 = vmatprep.subr.bf16.mxu0 0
    %679 = vmatpush1.bf16.msra.mxu0 %v507
    %680 = vmatprep.subr.bf16.mxu0 0
    %681 = vmatpush1.bf16.msra.mxu0 %v506
    %682 = vmatprep.subr.bf16.mxu0 0
    %683 = vmatpush1.bf16.msra.mxu0 %v505
    %684 = vmatprep.subr.bf16.mxu0 0
    %685 = vmatpush1.bf16.msra.mxu0 %v504
    %686 = vmatprep.subr.bf16.mxu0 0
    %687 = vmatpush1.bf16.msra.mxu0 %v503
    %688 = vmatprep.subr.bf16.mxu0 0
    %689 = vmatpush1.bf16.msra.mxu0 %v502
    %690 = vmatprep.subr.bf16.mxu0 0
    %691 = vmatpush1.bf16.msra.mxu0 %v501
    %692 = vmatprep.subr.bf16.mxu0 0
    %693 = vmatpush1.bf16.msra.mxu0 %v500
    %694 = vmatprep.subr.bf16.mxu0 0
    %695 = vmatpush2.bf16.msra.mxu0 %v515
    %696 = vmatprep.subr.bf16.mxu0 0
    %697 = vmatpush2.bf16.msra.mxu0 %v514
    %698 = vmatprep.subr.bf16.mxu0 0
    %699 = vmatpush2.bf16.msra.mxu0 %v513
    %700 = vmatprep.subr.bf16.mxu0 0
    %701 = vmatpush2.bf16.msra.mxu0 %v512
    %702 = vmatprep.subr.bf16.mxu0 0
    %703 = vmatpush2.bf16.msra.mxu0 %v511
    %704 = vmatprep.subr.bf16.mxu0 0
    %705 = vmatpush2.bf16.msra.mxu0 %v510
    %706 = vmatprep.subr.bf16.mxu0 0
    %707 = vmatpush2.bf16.msra.mxu0 %v509
    %708 = vmatprep.subr.bf16.mxu0 0
    %709 = vmatpush2.bf16.msra.mxu0 %v508
    %710 = vmatprep.mubr.bf16.mxu0 %v81
    %711 = vmatmul.mubr.bf16.gmra.mxu0 %v80
    %v712 = vpop.f32.mrf.mxu0
    %v713 = vadd.f32 %v672, %v712
    %v714 = vpop.f32.mrf.mxu0
    %v715 = vpop.f32.mrf.mxu0
    %v716 = vadd.f32 %v675, %v715
    %v717 = vpop.f32.mrf.mxu0
    %718 = vdwg.mxu0
    %719 = vmatprep.subr.bf16.mxu0 0
    %720 = vmatpush1.bf16.msra.mxu0 %v523
    %721 = vmatprep.subr.bf16.mxu0 0
    %722 = vmatpush1.bf16.msra.mxu0 %v522
    %723 = vmatprep.subr.bf16.mxu0 0
    %724 = vmatpush1.bf16.msra.mxu0 %v521
    %725 = vmatprep.subr.bf16.mxu0 0
    %726 = vmatpush1.bf16.msra.mxu0 %v520
    %727 = vmatprep.subr.bf16.mxu0 0
    %728 = vmatpush1.bf16.msra.mxu0 %v519
    %729 = vmatprep.subr.bf16.mxu0 0
    %730 = vmatpush1.bf16.msra.mxu0 %v518
    %731 = vmatprep.subr.bf16.mxu0 0
    %732 = vmatpush1.bf16.msra.mxu0 %v517
    %733 = vmatprep.subr.bf16.mxu0 0
    %734 = vmatpush1.bf16.msra.mxu0 %v516
    %735 = vmatprep.subr.bf16.mxu0 0
    %736 = vmatpush2.bf16.msra.mxu0 %v531
    %737 = vmatprep.subr.bf16.mxu0 0
    %738 = vmatpush2.bf16.msra.mxu0 %v530
    %739 = vmatprep.subr.bf16.mxu0 0
    %740 = vmatpush2.bf16.msra.mxu0 %v529
    %741 = vmatprep.subr.bf16.mxu0 0
    %742 = vmatpush2.bf16.msra.mxu0 %v528
    %743 = vmatprep.subr.bf16.mxu0 0
    %744 = vmatpush2.bf16.msra.mxu0 %v527
    %745 = vmatprep.subr.bf16.mxu0 0
    %746 = vmatpush2.bf16.msra.mxu0 %v526
    %747 = vmatprep.subr.bf16.mxu0 0
    %748 = vmatpush2.bf16.msra.mxu0 %v525
    %749 = vmatprep.subr.bf16.mxu0 0
    %750 = vmatpush2.bf16.msra.mxu0 %v524
    %751 = vmatprep.mubr.bf16.mxu0 %v83
    %752 = vmatmul.mubr.bf16.gmra.mxu0 %v82
    %v753 = vpop.f32.mrf.mxu0
    %v754 = vadd.f32 %v713, %v753
    %v755 = vpop.f32.mrf.mxu0
    %v756 = vpop.f32.mrf.mxu0
    %v757 = vadd.f32 %v716, %v756
    %v758 = vpop.f32.mrf.mxu0
    %759 = vdwg.mxu0
    %v760 = vmul.f32 %v754, 0.01
    %v761 = vmul.f32 %v757, 0.01
    %v762 = vmax.f32 %v754, %v760
    %v763 = vmax.f32 %v757, %v761
    %v764 = vpack.c.bf16 %v763, %v762
    %v765 = vld [vmem:[#allocation7] sm:$0xf]
    %v766 = vld [vmem:[#allocation7 + $0x4] sm:$0xf]
    %v767 = vld [vmem:[#allocation7 + $0x8] sm:$0xf]
    %v768 = vld [vmem:[#allocation7 + $0xc] sm:$0xf]
    %v769 = vld [vmem:[#allocation7 + $0x10] sm:$0xf]
    %v770 = vld [vmem:[#allocation7 + $0x14] sm:$0xf]
    %v771 = vld [vmem:[#allocation7 + $0x18] sm:$0xf]
    %v772 = vld [vmem:[#allocation7 + $0x1c] sm:$0xf]
    %v773 = vld [vmem:[#allocation7 + $0x20] sm:$0xf]
    %v774 = vld [vmem:[#allocation7 + $0x24] sm:$0xf]
    %v775 = vld [vmem:[#allocation7 + $0x28] sm:$0xf]
    %v776 = vld [vmem:[#allocation7 + $0x2c] sm:$0xf]
    %v777 = vld [vmem:[#allocation7 + $0x30] sm:$0xf]
    %v778 = vld [vmem:[#allocation7 + $0x34] sm:$0xf]
    %v779 = vld [vmem:[#allocation7 + $0x38] sm:$0xf]
    %v780 = vld [vmem:[#allocation7 + $0x3c] sm:$0xf]
    %v781 = vld [vmem:[%s3] sm:$0x1]
    %v783 = vlaneseq
    %v784 = vshrl.u32 %v783, 7
    %v785 = vsub.s32 0, %v784
    %v786 = vrot.slane %v781, %v785
    %v804 = vunpack.c.l.b16 %v765
    %v805 = vunpack.c.l.b16 %v766
    %v806 = vunpack.c.l.b16 %v767
    %v807 = vunpack.c.l.b16 %v768
    %v808 = vunpack.c.l.b16 %v769
    %v809 = vunpack.c.l.b16 %v770
    %v810 = vunpack.c.l.b16 %v771
    %v811 = vunpack.c.l.b16 %v772
    %v812 = vunpack.c.l.b16 %v773
    %v813 = vunpack.c.l.b16 %v774
    %v814 = vunpack.c.l.b16 %v775
    %v815 = vunpack.c.l.b16 %v776
    %v816 = vunpack.c.l.b16 %v777
    %v817 = vunpack.c.l.b16 %v778
    %v818 = vunpack.c.l.b16 %v779
    %v819 = vunpack.c.l.b16 %v780
    %v820 = vpack.c.b16 %v805, %v804
    %v821 = vpack.c.b16 %v807, %v806
    %v822 = vpack.c.b16 %v809, %v808
    %v823 = vpack.c.b16 %v811, %v810
    %v824 = vpack.c.b16 %v813, %v812
    %v825 = vpack.c.b16 %v815, %v814
    %v826 = vpack.c.b16 %v817, %v816
    %v827 = vpack.c.b16 %v819, %v818
    %836 = vmatprep.subr.bf16.mxu0 0
    %837 = vmatpush1.bf16.msra.mxu0 %v827
    %838 = vmatprep.subr.bf16.mxu0 0
    %839 = vmatpush1.bf16.msra.mxu0 %v826
    %840 = vmatprep.subr.bf16.mxu0 0
    %841 = vmatpush1.bf16.msra.mxu0 %v825
    %842 = vmatprep.subr.bf16.mxu0 0
    %843 = vmatpush1.bf16.msra.mxu0 %v824
    %844 = vmatprep.subr.bf16.mxu0 0
    %845 = vmatpush1.bf16.msra.mxu0 %v823
    %846 = vmatprep.subr.bf16.mxu0 0
    %847 = vmatpush1.bf16.msra.mxu0 %v822
    %848 = vmatprep.subr.bf16.mxu0 0
    %849 = vmatpush1.bf16.msra.mxu0 %v821
    %850 = vmatprep.subr.bf16.mxu0 0
    %851 = vmatpush1.bf16.msra.mxu0 %v820
    %852 = vmatprep.subr.bf16.mxu0 0
    %853 = vmatpush2.bf16.msra.mxu0 0
    %854 = vmatprep.subr.bf16.mxu0 0
    %855 = vmatpush2.bf16.msra.mxu0 0
    %856 = vmatprep.subr.bf16.mxu0 0
    %857 = vmatpush2.bf16.msra.mxu0 0
    %858 = vmatprep.subr.bf16.mxu0 0
    %859 = vmatpush2.bf16.msra.mxu0 0
    %860 = vmatprep.subr.bf16.mxu0 0
    %861 = vmatpush2.bf16.msra.mxu0 0
    %862 = vmatprep.subr.bf16.mxu0 0
    %863 = vmatpush2.bf16.msra.mxu0 0
    %864 = vmatprep.subr.bf16.mxu0 0
    %865 = vmatpush2.bf16.msra.mxu0 0
    %866 = vmatprep.subr.bf16.mxu0 0
    %867 = vmatpush2.bf16.msra.mxu0 0
    %868 = vmatprep.mubr.bf16.mxu0 0
    %869 = vmatmul.mubr.bf16.gmra.mxu0 %v764
    %v870 = vpop.f32.mrf.mxu0
    %v871 = vadd.f32 %v786, %v870
    %v872 = vpop.f32.mrf.mxu0
    %v873 = vpop.f32.mrf.mxu0
    %v874 = vadd.f32 %v786, %v873
    %v875 = vpop.f32.mrf.mxu0
    %876 = vdwg.mxu0
    %877 = vst [vmem:[#allocation8] sm:$0xff] %v871
    %878 = vst [vmem:[#allocation8 + $0x8] sm:$0xff] %v874
    // Predicated region
    $region30: #{tpu_custom_call.1} parent=1 // pred_check
      _
    $region31: #{tpu_custom_call.1} parent=1 // pred_check_branch
      %880 = sbr.rel (0) target = $region33
    $region32: #{tpu_custom_call.1} parent=1 // pred_region
      %s882 = ssub.s32 256, 256
      %883 = vsyncadd [#allocation4], %s882
      %s884 = sshll.u32 [#allocation8], 4
      %s885 = int_to_ptr.vmem [resolvable:$true] %s884
      %890 = dma.vmem_to_hbm [thread:$0]  %s885, 256, %s4, [#allocation4], 128, 128, 8
    $region33: #{tpu_custom_call.1} parent=1 // pred_fallthru
      _
    // Predicated region
    $region34: #{tpu_custom_call.1} parent=1 // pred_check
      _
    $region35: #{tpu_custom_call.1} parent=1 // pred_check_branch
      %892 = sbr.rel (0) target = $region37
    $region36: #{tpu_custom_call.1} parent=1 // pred_region
      %893 = dma.done [#allocation4], 256
    $region37: #{tpu_custom_call.1} parent=1 // pred_fallthru
      _
    %894 = vsyncpa [#allocation3], 1
    %895 = vsyncpa [#allocation6], 1
    %896 = vsyncpa [#allocation4], 1

</llo_original>
